<compile_context>
chip_gen: v6e
topology: v6e:2x2x1
jax: 0.10.0
libtpu: 0.0.40
codegen_flags: <defaults>
</compile_context>

<pallas_src>
import functools

import jax
import jax.numpy as jnp
from jax.experimental import pallas as pl
from jax.experimental.pallas import tpu as pltpu


def _round_up(a, b):
    return (a + b - 1) // b * b


def _device_budget():
    """Return (vmem_limit_bytes, max_rows) tuned per TPU generation.

    v5e/v6e have 128 MiB physical VMEM -> large tiles and a high cap.
    v7x has 64 MiB per TensorCore (or unknown chip) -> conservative budget.
    """
    try:
        cap = int(pltpu.get_tpu_info().vmem_capacity_bytes)
    except Exception:
        cap = 64 * 1024 * 1024
    if cap >= 100 * 1024 * 1024:
        return 96 * 1024 * 1024, 1024
    return 32 * 1024 * 1024, 512


def _pick_batch_tile(n, s, max_rows, min_grid=2):
    """Largest divisor nb of n with nb*s rows per grid step <= max_rows,
    keeping at least `min_grid` grid steps when n allows it (v7x shards the
    parallel grid axis over its 2 TensorCores)."""
    best = 1
    for cand in range(1, n + 1):
        if n % cand != 0 or cand * s > max_rows:
            continue
        if n >= min_grid and n // cand < min_grid:
            continue
        best = cand
    return best


# ----------------------------------------------------------------------------
# Kernel 1: patch embedding  (nb*S, CPPp) @ (CPPp, E) + (conv bias + pos. enc.)
# ----------------------------------------------------------------------------
def patch_embed_kernel(xp_ref, w_ref, bp_ref, o_ref):
    nb, S, K = xp_ref.shape
    E = w_ref.shape[1]
    x2 = xp_ref[...].reshape(nb * S, K)                      # bf16
    y = jnp.dot(x2, w_ref[...], preferred_element_type=jnp.float32)
    o_ref[...] = y.reshape(nb, S, E) + bp_ref[...]           # (S,E) broadcasts


def run_patch_embed(xp, w2d, bias_pe, *, vmem_limit, max_rows):
    N, S, K = xp.shape
    E = w2d.shape[1]
    nb = _pick_batch_tile(N, S, max_rows)
    return pl.pallas_call(
        patch_embed_kernel,
        out_shape=jax.ShapeDtypeStruct((N, S, E), jnp.float32),
        grid=(N // nb,),
        in_specs=[
            pl.BlockSpec((nb, S, K), lambda n: (n, 0, 0)),
            pl.BlockSpec((K, E), lambda n: (0, 0)),      # VMEM-resident weight
            pl.BlockSpec((S, E), lambda n: (0, 0)),      # VMEM-resident bias+PE
        ],
        out_specs=pl.BlockSpec((nb, S, E), lambda n: (n, 0, 0)),
        compiler_params=pltpu.CompilerParams(
            dimension_semantics=("parallel",),
            vmem_limit_bytes=vmem_limit),
    )(xp, w2d, bias_pe)


# ----------------------------------------------------------------------------
# Kernel 2: fused L-layer transformer encoder stack (weights VMEM-resident,
#           L statically unrolled, single batch-tile grid axis)
# ----------------------------------------------------------------------------
def encoder_stack_kernel(x_ref, qkvw_ref, outw_ref, l1w_ref, l2w_ref, vec_ref,
                         o_ref, *, num_heads, num_layers):
    nb, S, E = x_ref.shape
    H = num_heads
    D = E // H
    Fd = l1w_ref.shape[2]
    rows = nb * S

    def layer_norm(y, w, b):
        mu = jnp.mean(y, axis=-1, keepdims=True)
        yc = y - mu
        var = jnp.mean(yc * yc, axis=-1, keepdims=True)
        return yc * jax.lax.rsqrt(var + 1e-5) * w + b

    x2 = x_ref[...].reshape(rows, E)                         # (rows, E) f32

    for l in range(num_layers):                              # static unroll
        # Packed bias / LayerNorm parameter vector for layer l.
        vec = vec_ref[l]                                     # (1, 9E + F) f32
        qkv_b = vec[:, 0 * E:3 * E]
        out_b = vec[:, 3 * E:4 * E]
        ln1_w = vec[:, 4 * E:5 * E]
        ln1_b = vec[:, 5 * E:6 * E]
        lin1_b = vec[:, 6 * E:6 * E + Fd]
        lin2_b = vec[:, 6 * E + Fd:7 * E + Fd]
        ln2_w = vec[:, 7 * E + Fd:8 * E + Fd]
        ln2_b = vec[:, 8 * E + Fd:9 * E + Fd]

        # Fused QKV projection over all nb*S rows (one MXU weight push).
        qkv = jnp.dot(x2.astype(jnp.bfloat16), qkvw_ref[l],
                      preferred_element_type=jnp.float32) + qkv_b    # (rows,3E)
        # 1/sqrt(D) scale is folded into the q columns at parameter-prep time.
        q = qkv[:, 0 * E:1 * E].reshape(nb, S, E).astype(jnp.bfloat16)
        k = qkv[:, 1 * E:2 * E].reshape(nb, S, E).astype(jnp.bfloat16)
        v = qkv[:, 2 * E:3 * E].reshape(nb, S, E).astype(jnp.bfloat16)

        ow = outw_ref[l]                                     # (E, E) bf16
        attn = None
        for h in range(H):
            qh = q[:, :, h * D:(h + 1) * D]                  # (nb, S, D)
            kh = k[:, :, h * D:(h + 1) * D]
            vh = v[:, :, h * D:(h + 1) * D]
            s = jnp.einsum('bqd,bkd->bqk', qh, kh,
                           preferred_element_type=jnp.float32)       # (nb,S,S)
            m = jnp.max(s, axis=-1, keepdims=True)
            e = jnp.exp((s - m).astype(jnp.bfloat16))        # bf16 EUP path
            denom = jnp.sum(e.astype(jnp.float32), axis=-1, keepdims=True)
            p = (e * pl.reciprocal(denom, approx=True)).astype(jnp.bfloat16)
            ctx = jnp.einsum('bqk,bkd->bqd', p, vh,
                             preferred_element_type=jnp.float32)     # (nb,S,D)
            # Project each head through its (D, E) slice of the output weight
            # and accumulate in f32 (avoids concatenating head contexts).
            part = jnp.dot(ctx.reshape(rows, D).astype(jnp.bfloat16),
                           ow[h * D:(h + 1) * D, :],
                           preferred_element_type=jnp.float32)
            attn = part if attn is None else attn + part

        # Post-norm residual blocks (dropout = identity, eval semantics).
        x1 = layer_norm(x2 + attn + out_b, ln1_w, ln1_b)              # (rows,E)
        h1 = jnp.maximum(
            jnp.dot(x1.astype(jnp.bfloat16), l1w_ref[l],
                    preferred_element_type=jnp.float32) + lin1_b, 0.0)
        ff = jnp.dot(h1.astype(jnp.bfloat16), l2w_ref[l],
                     preferred_element_type=jnp.float32) + lin2_b
        x2 = layer_norm(x1 + ff, ln2_w, ln2_b)

    o_ref[...] = x2.reshape(nb, S, E).astype(o_ref.dtype)


def run_encoder_stack(h0, enc, num_heads, *, vmem_limit, max_rows):
    N, S, E = h0.shape
    L = enc["qkv_w"].shape[0]
    Fd = enc["lin1_w"].shape[2]
    PT = enc["vec"].shape[2]
    nb = _pick_batch_tile(N, S, max_rows)
    kernel = functools.partial(encoder_stack_kernel, num_heads=num_heads,
                               num_layers=L)
    resident = lambda n: (0, 0, 0)   # constant block index -> DMA'd once
    return pl.pallas_call(
        kernel,
        out_shape=jax.ShapeDtypeStruct((N, S, E), jnp.float32),
        grid=(N // nb,),
        in_specs=[
            pl.BlockSpec((nb, S, E), lambda n: (n, 0, 0)),
            pl.BlockSpec((L, E, 3 * E), resident),
            pl.BlockSpec((L, E, E), resident),
            pl.BlockSpec((L, E, Fd), resident),
            pl.BlockSpec((L, Fd, E), resident),
            pl.BlockSpec((L, 1, PT), resident),
        ],
        out_specs=pl.BlockSpec((nb, S, E), lambda n: (n, 0, 0)),
        compiler_params=pltpu.CompilerParams(
            dimension_semantics=("parallel",),
            vmem_limit_bytes=vmem_limit),
    )(h0, enc["qkv_w"], enc["out_w"], enc["lin1_w"], enc["lin2_w"], enc["vec"])


# ----------------------------------------------------------------------------
# Module-level glue (plain JAX)
# ----------------------------------------------------------------------------
def positional_encoding_1d(S, E):
    """Same formula as the PyTorch module: [sin | cos] halves along E."""
    position = jnp.arange(S, dtype=jnp.float32)[:, None]             # (S, 1)
    index = jnp.arange(0, E, 2, dtype=jnp.float32)[None, :]          # (1, E/2)
    div_term = jnp.exp(index * (-jnp.log(10000.0) / E))
    pe = position * div_term                                         # (S, E/2)
    return jnp.concatenate([jnp.sin(pe), jnp.cos(pe)], axis=1)       # (S, E)


def prepare_encoder_params(layers, num_heads):
    """Fuse QKV, fold the attention scale, stack layers, pack bias vectors."""
    E = layers[0]["q_w"].shape[0]
    D = E // num_heads
    scale = 1.0 / (D ** 0.5)
    qkv_ws, out_ws, l1_ws, l2_ws, vecs = [], [], [], [], []
    for lp in layers:
        qkv_w = jnp.concatenate([lp["q_w"] * scale, lp["k_w"], lp["v_w"]],
                                axis=1)                               # (E, 3E)
        qkv_b = jnp.concatenate([lp["qkv_b"][0, :E] * scale,
                                 lp["qkv_b"][0, E:]], axis=0)         # (3E,)
        vec = jnp.concatenate([
            qkv_b, lp["out_b"][0], lp["ln1_w"][0], lp["ln1_b"][0],
            lp["lin1_b"][0], lp["lin2_b"][0], lp["ln2_w"][0], lp["ln2_b"][0]],
            axis=0)                                                   # (9E+F,)
        qkv_ws.append(qkv_w)
        out_ws.append(lp["out_w"])
        l1_ws.append(lp["lin1_w"])
        l2_ws.append(lp["lin2_w"])
        vecs.append(vec)
    return dict(
        qkv_w=jnp.stack(qkv_ws).astype(jnp.bfloat16),       # (L, E, 3E)
        out_w=jnp.stack(out_ws).astype(jnp.bfloat16),       # (L, E, E)
        lin1_w=jnp.stack(l1_ws).astype(jnp.bfloat16),       # (L, E, F)
        lin2_w=jnp.stack(l2_ws).astype(jnp.bfloat16),       # (L, F, E)
        vec=jnp.stack(vecs)[:, None, :].astype(jnp.float32),  # (L, 1, 9E+F)
    )


def patch_transformer_encoder(x, params, patch_size, num_heads):
    """Forward pass. x: (N, C, H, W) float32 -> (S, N, E) float32."""
    N, C, H, W = x.shape
    P = patch_size
    Hp, Wp = H // P, W // P
    S = Hp * Wp
    E = params["conv_w"].shape[0]
    CPP = C * P * P

    vmem_limit, max_rows = _device_budget()

    # Patch extraction (= Conv2d with stride == kernel, padding 0); flatten
    # order (c, i, j) matches conv_w.reshape(E, C*P*P).
    xp = (x.reshape(N, C, Hp, P, Wp, P)
            .transpose(0, 2, 4, 1, 3, 5)
            .reshape(N, S, CPP))
    w2d = params["conv_w"].reshape(E, CPP).T                          # (CPP, E)

    # Pad the contraction dim to a lane multiple; the whole (CPPp, E) weight
    # stays VMEM-resident so no K-tiling / accumulator scratch is needed.
    # TODO(synk): fall back to a K-tiled accumulator if CPPp*E ever exceeds VMEM.
    CPPp = _round_up(CPP, 128)
    if CPPp != CPP:
        xp = jnp.pad(xp, ((0, 0), (0, 0), (0, CPPp - CPP)))
        w2d = jnp.pad(w2d, ((0, CPPp - CPP), (0, 0)))

    # Conv bias + positional encoding, shared across the batch (no jnp.tile).
    bias_pe = positional_encoding_1d(S, E) + params["conv_b"][None, :]

    emb = run_patch_embed(xp.astype(jnp.bfloat16), w2d.astype(jnp.bfloat16),
                          bias_pe, vmem_limit=vmem_limit, max_rows=max_rows)

    enc = prepare_encoder_params(params["layers"], num_heads)
    h = run_encoder_stack(emb, enc, num_heads,
                          vmem_limit=vmem_limit, max_rows=max_rows)   # (N,S,E)

    return jnp.transpose(h, (1, 0, 2))                                # (S,N,E)


def init_params(key, in_channels, patch_size, embedding_dim, dim_feedforward,
                num_layers):
    C, P, E, F = in_channels, patch_size, embedding_dim, dim_feedforward
    keys = jax.random.split(key, 2 + num_layers)
    params = {
        "conv_w": 0.02 * jax.random.normal(keys[0], (E, C, P, P), jnp.float32),
        "conv_b": 0.02 * jax.random.normal(keys[1], (E,), jnp.float32),
        "layers": [],
    }
    for l in range(num_layers):
        lk = jax.random.split(keys[2 + l], 6)
        params["layers"].append(dict(
            q_w=0.02 * jax.random.normal(lk[0], (E, E), jnp.float32),
            k_w=0.02 * jax.random.normal(lk[1], (E, E), jnp.float32),
            v_w=0.02 * jax.random.normal(lk[2], (E, E), jnp.float32),
            qkv_b=jnp.zeros((1, 3 * E), jnp.float32),
            out_w=0.02 * jax.random.normal(lk[3], (E, E), jnp.float32),
            out_b=jnp.zeros((1, E), jnp.float32),
            ln1_w=jnp.ones((1, E), jnp.float32),
            ln1_b=jnp.zeros((1, E), jnp.float32),
            lin1_w=0.02 * jax.random.normal(lk[4], (E, F), jnp.float32),
            lin1_b=jnp.zeros((1, F), jnp.float32),
            lin2_w=0.02 * jax.random.normal(lk[5], (F, E), jnp.float32),
            lin2_b=jnp.zeros((1, E), jnp.float32),
            ln2_w=jnp.ones((1, E), jnp.float32),
            ln2_b=jnp.zeros((1, E), jnp.float32),
        ))
    return params


if __name__ == "__main__":
    # Small, module-consistent shapes (real ZoeDepth: E=128, F=1024, 4 layers).
    N, C, H, W = 2, 4, 16, 16
    patch_size = 4
    embedding_dim = 32
    num_heads = 4
    dim_feedforward = 1024   # hardcoded in the PyTorch module
    num_layers = 4

    key = jax.random.PRNGKey(0)
    kx, kp = jax.random.split(key)
    x = jax.random.normal(kx, (N, C, H, W), jnp.float32)
    params = init_params(kp, C, patch_size, embedding_dim, dim_feedforward,
                         num_layers)

    out = patch_transformer_encoder(x, params, patch_size, num_heads)
    out = jax.block_until_ready(out)

    S = (H // patch_size) * (W // patch_size)
    assert out.shape == (S, N, embedding_dim), out.shape
    assert bool(jnp.all(jnp.isfinite(out)))
    print("KERNEL_OK")
</pallas_src>

<mosaic_0001>
module attributes {stable_mosaic.version = 11 : i64} {
  func.func @patch_embed_kernel(%arg0: i32, %arg1: memref<1x16x128xbf16, #tpu.memory_space<vmem>>, %arg2: memref<128x32xbf16, #tpu.memory_space<vmem>>, %arg3: memref<16x32xf32, #tpu.memory_space<vmem>>, %arg4: memref<1x16x32xf32, #tpu.memory_space<vmem>>) attributes {dimension_semantics = [#tpu.dimension_semantics<parallel>], iteration_bounds = array<i64: 2>, scalar_prefetch = 0 : i64, scratch_operands = 0 : i64, tpu.core_type = #tpu.core_type<tc>, window_params = [{transform_indices = @transform_0, window_bounds = array<i64: 1, 16, 128>}, {pipeline_mode = #tpu.pipeline_mode<synchronous>, transform_indices = @transform_1, window_bounds = array<i64: 128, 32>}, {pipeline_mode = #tpu.pipeline_mode<synchronous>, transform_indices = @transform_2, window_bounds = array<i64: 16, 32>}, {transform_indices = @transform_3, window_bounds = array<i64: 1, 16, 32>}]} {
    %c0 = arith.constant 0 : index
    %c0_0 = arith.constant 0 : index
    %c0_1 = arith.constant 0 : index
    %0 = vector.load %arg1[%c0, %c0_0, %c0_1] : memref<1x16x128xbf16, #tpu.memory_space<vmem>>, vector<1x16x128xbf16>
    %1 = vector.shape_cast %0 : vector<1x16x128xbf16> to vector<16x128xbf16>
    %c0_2 = arith.constant 0 : index
    %c0_3 = arith.constant 0 : index
    %2 = vector.load %arg2[%c0_2, %c0_3] : memref<128x32xbf16, #tpu.memory_space<vmem>>, vector<128x32xbf16>
    %cst = arith.constant dense<0.000000e+00> : vector<16x32xf32>
    %3 = tpu.matmul %1, %2, %cst {dimension_numbers = #tpu.dot_dimension_numbers<[1], [0], [0], [1], [0, 0, 1, 1], [], []>} : vector<16x128xbf16>, vector<128x32xbf16>, vector<16x32xf32> -> vector<16x32xf32>
    %4 = vector.shape_cast %3 : vector<16x32xf32> to vector<1x16x32xf32>
    %c0_4 = arith.constant 0 : index
    %c0_5 = arith.constant 0 : index
    %5 = vector.load %arg3[%c0_4, %c0_5] : memref<16x32xf32, #tpu.memory_space<vmem>>, vector<16x32xf32>
    %6 = vector.shape_cast %5 : vector<16x32xf32> to vector<1x16x32xf32>
    %7 = arith.addf %4, %6 : vector<1x16x32xf32>
    %c0_6 = arith.constant 0 : index
    %c0_7 = arith.constant 0 : index
    %c0_8 = arith.constant 0 : index
    %8 = vector.load %arg4[%c0_6, %c0_7, %c0_8] : memref<1x16x32xf32, #tpu.memory_space<vmem>>, vector<1x16x32xf32>
    tpu.vector_store %arg4[%c0_6, %c0_7, %c0_8], %7 {strides = array<i32>} : memref<1x16x32xf32, #tpu.memory_space<vmem>>, vector<1x16x32xf32>,
    return
  }
  func.func @transform_0(%arg0: i32) -> (i32, i32, i32) {
    %c0_i32 = arith.constant 0 : i32
    %c0_i32_0 = arith.constant 0 : i32
    %c0_i32_1 = arith.constant 0 : i32
    return %arg0, %c0_i32, %c0_i32_0 : i32, i32, i32
  }
  func.func @transform_1(%arg0: i32) -> (i32, i32) {
    %c0_i32 = arith.constant 0 : i32
    %c0_i32_0 = arith.constant 0 : i32
    %c0_i32_1 = arith.constant 0 : i32
    return %c0_i32, %c0_i32_0 : i32, i32
  }
  func.func @transform_2(%arg0: i32) -> (i32, i32) {
    %c0_i32 = arith.constant 0 : i32
    %c0_i32_0 = arith.constant 0 : i32
    %c0_i32_1 = arith.constant 0 : i32
    return %c0_i32, %c0_i32_0 : i32, i32
  }
  func.func @transform_3(%arg0: i32) -> (i32, i32, i32) {
    %c0_i32 = arith.constant 0 : i32
    %c0_i32_0 = arith.constant 0 : i32
    %c0_i32_1 = arith.constant 0 : i32
    return %arg0, %c0_i32, %c0_i32_0 : i32, i32, i32
  }
}

</mosaic_0001>

<llo_original>
// kernel: tpu_custom_call.1
$region0: #{tpu_custom_call.1}
  #allocation0 [shape = 'u32[]', space=smem, size = 0x4, offset = 0x4, fixed_abs, tag = 'smem constant byte address 0x4 - core index']
  #allocation1 [shape = 'u32[144,128]{1,0:T(1,128)}', space=vmem, size = 0x12000, scoped, tag = 'internal scratch']
  %s0 = inlined_call_operand.vmem [shape: bf16[2,16,128], index: 0, kind: input, shape index: {}]
  %s1 = inlined_call_operand.vmem [shape: bf16[128,32], index: 1, kind: input, shape index: {}]
  %s2 = inlined_call_operand.vmem [shape: f32[16,32], index: 2, kind: input, shape index: {}]
  %s3 = inlined_call_operand.hbm [shape: f32[2,16,32], index: 3, kind: output, shape index: {}]
  %s4 = sld [smem:[#allocation0]]
  $region45: #{tpu_custom_call.1} parent=0
    _
  %s6 = ssub.s32 1, %s4
  %s7 = scalar_select 0, %s6, %s4
  $region1: #{tpu_custom_call.1} parent=0
    #allocation2 [shape = 'u8[16384]{0}', space=vmem, size = 0x4000, scoped, tag = 'output window, operand 0']
    #allocation3 [shape = 's32[2]{0}', space=sflag, size = 0x8, scoped, tag = 'scoped memory for tpu_custom_call.1']
    %8 = vsyncpa [#allocation3], 0
    %s9 = scalar_lea.sflag [#allocation3], 1
    %10 = vsyncpa %s9, 0
    loop: start=0, step=1, limit=4
    $region2: #{tpu_custom_call.1} parent=1 // loop_pre_header
      _
    $region3: #{tpu_custom_call.1} parent=1 // loop_header
      %s12 = sphi 0, %s16
      %p13 = scmp.ge.s32.totalorder %s12, 4
      %s22 = sphi 0, %s24
      %s25 = sphi 0, %s22
      %s26 = sphi 0, %s25
      %s42 = sphi 0, %s26
      %s46 = sphi 0, %s46
      %s48 = sphi 0, %s46
      %s49 = sphi 0, %s48
      %s63 = sphi 0, %s49
      %s67 = sphi 0, %s67
      %s69 = sphi 0, %s67
      %s70 = sphi 0, %s69
      %s84 = sphi 0, %s70
      %s90 = sphi 0, %s92
      %s93 = sphi 0, %s90
      %s94 = sphi 0, %s93
      %s110 = sphi 0, %s94
    $region4: #{tpu_custom_call.1} parent=1 // loop_header_branch
      %15 = sbr.rel (%p13) target = $region8
    $region5: #{tpu_custom_call.1} parent=1 // loop_body
      %s17 = ssub.s32 %s12, 1
      %s18 = ssub.s32 %s12, 2
      %s19 = sadd.s32 %s12, 1
      %s20 = ssub.s32 %s12, %s19
      %p21 = scmp.eq.s32.totalorder %s20, 0
      %s23 = sadd.s32 %s22, 1
      %s24 = scalar_select %p21, %s22, %s23
      %p27 = pneg %p21
      %p28 = scmp.eq.s32.totalorder %s12, 1
      %p29 = por %p27, %p28
      %p30 = scmp.ne.s32.totalorder %s22, %s25
      %p31 = scmp.eq.s32.totalorder %s12, 0
      %p32 = por %p30, %p31
      %p33 = scmp.ne.s32.totalorder %s22, %s25
      %p34 = scmp.eq.s32.totalorder %s17, 1
      %p35 = por %p33, %p34
      %p36 = scmp.ne.s32.totalorder %s25, %s26
      %p37 = scmp.eq.s32.totalorder %s17, 0
      %p38 = por %p36, %p37
      %p39 = scmp.ne.s32.totalorder %s25, %s26
      %p40 = scmp.eq.s32.totalorder %s18, 1
      %p41 = por %p39, %p40
      %p43 = scmp.ne.s32.totalorder %s26, %s42
      %p44 = scmp.eq.s32.totalorder %s18, 0
      %p45 = por %p43, %p44
      %s47 = sadd.s32 %s46, 1
      %p50 = scmp.eq.s32.totalorder %s12, 1
      %p51 = scmp.ne.s32.totalorder %s46, %s48
      %p52 = scmp.eq.s32.totalorder %s12, 0
      %p53 = por %p51, %p52
      %p54 = scmp.ne.s32.totalorder %s46, %s48
      %p55 = scmp.eq.s32.totalorder %s17, 1
      %p56 = por %p54, %p55
      %p57 = scmp.ne.s32.totalorder %s48, %s49
      %p58 = scmp.eq.s32.totalorder %s17, 0
      %p59 = por %p57, %p58
      %p60 = scmp.ne.s32.totalorder %s48, %s49
      %p61 = scmp.eq.s32.totalorder %s18, 1
      %p62 = por %p60, %p61
      %p64 = scmp.ne.s32.totalorder %s49, %s63
      %p65 = scmp.eq.s32.totalorder %s18, 0
      %p66 = por %p64, %p65
      %s68 = sadd.s32 %s67, 1
      %p71 = scmp.eq.s32.totalorder %s12, 1
      %p72 = scmp.ne.s32.totalorder %s67, %s69
      %p73 = scmp.eq.s32.totalorder %s12, 0
      %p74 = por %p72, %p73
      %p75 = scmp.ne.s32.totalorder %s67, %s69
      %p76 = scmp.eq.s32.totalorder %s17, 1
      %p77 = por %p75, %p76
      %p78 = scmp.ne.s32.totalorder %s69, %s70
      %p79 = scmp.eq.s32.totalorder %s17, 0
      %p80 = por %p78, %p79
      %p81 = scmp.ne.s32.totalorder %s69, %s70
      %p82 = scmp.eq.s32.totalorder %s18, 1
      %p83 = por %p81, %p82
      %p85 = scmp.ne.s32.totalorder %s70, %s84
      %p86 = scmp.eq.s32.totalorder %s18, 0
      %p87 = por %p85, %p86
      %s88 = ssub.s32 %s12, %s19
      %p89 = scmp.eq.s32.totalorder %s88, 0
      %s91 = sadd.s32 %s90, 1
      %s92 = scalar_select %p89, %s90, %s91
      %p95 = pneg %p89
      %p96 = scmp.eq.s32.totalorder %s12, 1
      %p97 = por %p95, %p96
      %p98 = scmp.ne.s32.totalorder %s90, %s93
      %p99 = scmp.eq.s32.totalorder %s12, 0
      %p100 = por %p98, %p99
      %p101 = scmp.ne.s32.totalorder %s90, %s93
      %p102 = scmp.eq.s32.totalorder %s17, 1
      %p103 = por %p101, %p102
      %p104 = scmp.ne.s32.totalorder %s93, %s94
      %p105 = scmp.eq.s32.totalorder %s17, 0
      %p106 = por %p104, %p105
      %p107 = scmp.ne.s32.totalorder %s93, %s94
      %p108 = scmp.eq.s32.totalorder %s18, 1
      %p109 = por %p107, %p108
      %p111 = scmp.ne.s32.totalorder %s94, %s110
      %p112 = scmp.eq.s32.totalorder %s18, 0
      %p113 = por %p111, %p112
      %p114 = scmp.le.s32.totalorder 1, %s12
      %p115 = scmp.lt.s32.totalorder %s12, 3
      %p116 = pnand %p114, %p115
      %p117 = pneg %p116
      // Predicated region
      $region9: #{tpu_custom_call.1} parent=5 // pred_check
        _
      $region10: #{tpu_custom_call.1} parent=5 // pred_check_branch
        %119 = sbr.rel (%p116) target = $region12
      $region11: #{tpu_custom_call.1} parent=5 // pred_region
        %s120 = ssub.s32 %s12, 1
        // Predicated region
        $region13: #{tpu_custom_call.1} parent=11 // pred_check
          %p121 = pneg %p59
        $region14: #{tpu_custom_call.1} parent=11 // pred_check_branch
          %123 = sbr.rel (%p121) target = $region16
        $region15: #{tpu_custom_call.1} parent=11 // pred_region
          _
        $region16: #{tpu_custom_call.1} parent=11 // pred_fallthru
          _
        // Predicated region
        $region17: #{tpu_custom_call.1} parent=11 // pred_check
          %p124 = pneg %p80
        $region18: #{tpu_custom_call.1} parent=11 // pred_check_branch
          %126 = sbr.rel (%p124) target = $region20
        $region19: #{tpu_custom_call.1} parent=11 // pred_region
          _
        $region20: #{tpu_custom_call.1} parent=11 // pred_fallthru
          _
      $region12: #{tpu_custom_call.1} parent=5 // pred_fallthru
        _
      %p127 = scmp.lt.s32.totalorder %s12, 2
      // Predicated region
      $region21: #{tpu_custom_call.1} parent=5 // pred_check
        %p128 = pneg %p127
      $region22: #{tpu_custom_call.1} parent=5 // pred_check_branch
        %130 = sbr.rel (%p128) target = $region24
      $region23: #{tpu_custom_call.1} parent=5 // pred_region
        // Predicated region
        $region25: #{tpu_custom_call.1} parent=23 // pred_check
          %p131 = pneg %p32
        $region26: #{tpu_custom_call.1} parent=23 // pred_check_branch
          %133 = sbr.rel (%p131) target = $region28
        $region27: #{tpu_custom_call.1} parent=23 // pred_region
          %p134 = scmp.lt.s32.totalorder %s12, 1
          %s135 = scalar_select %p134, %s12, 1
          %s136 = smul.addr %s135, 2
          %s137 = smul.addr %s136, 4
          %s138 = scalar_lea.vmem %s0, %s137
        $region28: #{tpu_custom_call.1} parent=23 // pred_fallthru
          _
      $region24: #{tpu_custom_call.1} parent=5 // pred_fallthru
        _
      %p139 = scmp.le.s32.totalorder 1, %s12
      %p140 = scmp.lt.s32.totalorder %s12, 3
      %p141 = pnand %p139, %p140
      %p142 = pneg %p141
      // Predicated region
      $region29: #{tpu_custom_call.1} parent=5 // pred_check
        _
      $region30: #{tpu_custom_call.1} parent=5 // pred_check_branch
        %144 = sbr.rel (%p141) target = $region32
      $region31: #{tpu_custom_call.1} parent=5 // pred_region
        %s145 = ssub.s32 %s12, 1
        %p146 = scmp.lt.s32.totalorder %s17, 1
        %s147 = scalar_select %p146, %s17, 1
        %s148 = smul.addr %s147, 2
        %s149 = smul.addr %s148, 4
        %s150 = scalar_lea.vmem %s0, %s149
        %p151 = pneg %p38
        %p152 = pneg %p35
        %p153 = pneg %p59
        %p154 = pneg %p56
        %p155 = pneg %p80
        %p156 = pneg %p77
        %p157 = pneg %p106
        %p158 = pneg %p103
        %s159 = sand.u32 %s93, 1
        %s160 = scalar_lea.sflag [#allocation3], %s159
        %s161 = sand.u32 %s93, 1
        %s162 = smul.addr %s161, 16
        %s163 = scalar_lea.vmem [#allocation2], %s162
        %p164 = scmp.lt.s32.totalorder %s17, 1
        %s165 = scalar_select %p164, %s17, 1
        %s166 = smul.addr %s165, 2
        %s167 = smul.addr %s166, 4
        %s168 = scalar_lea.vmem %s0, %s167
        %v170 = vld [vmem:[%s168] sm:$0xf]
        %v171 = vld [vmem:[%s168 + $0x4] sm:$0xf]
        %v172 = vld [vmem:[%s1] sm:$0xf]
        %v173 = vld [vmem:[%s1 + $0x4] sm:$0xf]
        %v174 = vld [vmem:[%s1 + $0x8] sm:$0xf]
        %v175 = vld [vmem:[%s1 + $0xc] sm:$0xf]
        %v176 = vld [vmem:[%s1 + $0x10] sm:$0xf]
        %v177 = vld [vmem:[%s1 + $0x14] sm:$0xf]
        %v178 = vld [vmem:[%s1 + $0x18] sm:$0xf]
        %v179 = vld [vmem:[%s1 + $0x1c] sm:$0xf]
        %v180 = vld [vmem:[%s1 + $0x20] sm:$0xf]
        %v181 = vld [vmem:[%s1 + $0x24] sm:$0xf]
        %v182 = vld [vmem:[%s1 + $0x28] sm:$0xf]
        %v183 = vld [vmem:[%s1 + $0x2c] sm:$0xf]
        %v184 = vld [vmem:[%s1 + $0x30] sm:$0xf]
        %v185 = vld [vmem:[%s1 + $0x34] sm:$0xf]
        %v186 = vld [vmem:[%s1 + $0x38] sm:$0xf]
        %v187 = vld [vmem:[%s1 + $0x3c] sm:$0xf]
        %v190 = vunpack.c.l.b16 %v170
        %v191 = vunpack.c.l.b16 %v171
        %v192 = vpack.c.b16 %v191, %v190
        %v210 = vunpack.c.l.b16 %v172
        %v211 = vunpack.c.l.b16 %v173
        %v212 = vunpack.c.l.b16 %v174
        %v213 = vunpack.c.l.b16 %v175
        %v214 = vunpack.c.l.b16 %v176
        %v215 = vunpack.c.l.b16 %v177
        %v216 = vunpack.c.l.b16 %v178
        %v217 = vunpack.c.l.b16 %v179
        %v218 = vunpack.c.l.b16 %v180
        %v219 = vunpack.c.l.b16 %v181
        %v220 = vunpack.c.l.b16 %v182
        %v221 = vunpack.c.l.b16 %v183
        %v222 = vunpack.c.l.b16 %v184
        %v223 = vunpack.c.l.b16 %v185
        %v224 = vunpack.c.l.b16 %v186
        %v225 = vunpack.c.l.b16 %v187
        %v226 = vpack.c.b16 %v211, %v210
        %v227 = vpack.c.b16 %v213, %v212
        %v228 = vpack.c.b16 %v215, %v214
        %v229 = vpack.c.b16 %v217, %v216
        %v230 = vpack.c.b16 %v219, %v218
        %v231 = vpack.c.b16 %v221, %v220
        %v232 = vpack.c.b16 %v223, %v222
        %v233 = vpack.c.b16 %v225, %v224
        %242 = vmatprep.subr.bf16.mxu0 0
        %243 = vmatpush1.bf16.msra.mxu0 %v233
        %244 = vmatprep.subr.bf16.mxu0 0
        %245 = vmatpush1.bf16.msra.mxu0 %v232
        %246 = vmatprep.subr.bf16.mxu0 0
        %247 = vmatpush1.bf16.msra.mxu0 %v231
        %248 = vmatprep.subr.bf16.mxu0 0
        %249 = vmatpush1.bf16.msra.mxu0 %v230
        %250 = vmatprep.subr.bf16.mxu0 0
        %251 = vmatpush1.bf16.msra.mxu0 %v229
        %252 = vmatprep.subr.bf16.mxu0 0
        %253 = vmatpush1.bf16.msra.mxu0 %v228
        %254 = vmatprep.subr.bf16.mxu0 0
        %255 = vmatpush1.bf16.msra.mxu0 %v227
        %256 = vmatprep.subr.bf16.mxu0 0
        %257 = vmatpush1.bf16.msra.mxu0 %v226
        %258 = vmatprep.subr.bf16.mxu0 0
        %259 = vmatpush2.bf16.msra.mxu0 0
        %260 = vmatprep.subr.bf16.mxu0 0
        %261 = vmatpush2.bf16.msra.mxu0 0
        %262 = vmatprep.subr.bf16.mxu0 0
        %263 = vmatpush2.bf16.msra.mxu0 0
        %264 = vmatprep.subr.bf16.mxu0 0
        %265 = vmatpush2.bf16.msra.mxu0 0
        %266 = vmatprep.subr.bf16.mxu0 0
        %267 = vmatpush2.bf16.msra.mxu0 0
        %268 = vmatprep.subr.bf16.mxu0 0
        %269 = vmatpush2.bf16.msra.mxu0 0
        %270 = vmatprep.subr.bf16.mxu0 0
        %271 = vmatpush2.bf16.msra.mxu0 0
        %272 = vmatprep.subr.bf16.mxu0 0
        %273 = vmatpush2.bf16.msra.mxu0 0
        %274 = vmatprep.mubr.bf16.mxu0 0
        %275 = vmatmul.mubr.bf16.gmra.mxu0 %v192
        %v276 = vpop.f32.mrf.mxu0
        %v277 = vadd.f32 0.0, %v276
        %v278 = vpop.f32.mrf.mxu0
        %v279 = vpop.f32.mrf.mxu0
        %v280 = vadd.f32 0.0, %v279
        %v281 = vpop.f32.mrf.mxu0
        %282 = vdwg.mxu0
        %v283 = vld [vmem:[%s2] sm:$0xff]
        %v284 = vld [vmem:[%s2 + $0x8] sm:$0xff]
        %v285 = vadd.f32 %v277, %v283
        %v286 = vadd.f32 %v280, %v284
        %vm287 = vcmask 261120
        %288 = vst.msk [vmem:[%s163] sm:$0xff] %vm287, %v285
        %289 = vst.msk [vmem:[%s163 + $0x8] sm:$0xff] %vm287, %v286
        %s290 = sand.u32 %s93, 1
        %s291 = scalar_lea.sflag [#allocation3], %s290
        %s292 = sand.u32 %s93, 1
        %s293 = smul.addr %s292, 16
        %s294 = scalar_lea.vmem [#allocation2], %s293
        // Predicated region
        $region33: #{tpu_custom_call.1} parent=31 // pred_check
          %p295 = pneg %p103
        $region34: #{tpu_custom_call.1} parent=31 // pred_check_branch
          %297 = sbr.rel (%p295) target = $region36
        $region35: #{tpu_custom_call.1} parent=31 // pred_region
          %s299 = ssub.s32 256, 256
          %300 = vsyncadd %s291, %s299
          %s301 = smul.addr %s17, 2
          %s302 = smul.addr %s301, 128
          %s303 = scalar_lea.hbm %s3, %s302
          %s304 = sshll.u32 %s294, 4
          %s305 = int_to_ptr.vmem [resolvable:$true] %s304
          %310 = dma.vmem_to_hbm [thread:$0]  %s305, 256, %s303, %s291, 128, 128, 8
        $region36: #{tpu_custom_call.1} parent=31 // pred_fallthru
          _
      $region32: #{tpu_custom_call.1} parent=5 // pred_fallthru
        _
      %p311 = scmp.le.s32.totalorder 2, %s12
      // Predicated region
      $region37: #{tpu_custom_call.1} parent=5 // pred_check
        %p312 = pneg %p311
      $region38: #{tpu_custom_call.1} parent=5 // pred_check_branch
        %314 = sbr.rel (%p312) target = $region40
      $region39: #{tpu_custom_call.1} parent=5 // pred_region
        %s315 = ssub.s32 %s12, 2
        // Predicated region
        $region41: #{tpu_custom_call.1} parent=39 // pred_check
          %p316 = pneg %p109
        $region42: #{tpu_custom_call.1} parent=39 // pred_check_branch
          %318 = sbr.rel (%p316) target = $region44
        $region43: #{tpu_custom_call.1} parent=39 // pred_region
          %s319 = sand.u32 %s94, 1
          %s320 = scalar_lea.sflag [#allocation3], %s319
          %s321 = sand.u32 %s94, 1
          %s322 = smul.addr %s321, 16
          %s323 = scalar_lea.vmem [#allocation2], %s322
          %324 = dma.done %s320, 256
        $region44: #{tpu_custom_call.1} parent=39 // pred_fallthru
          _
      $region40: #{tpu_custom_call.1} parent=5 // pred_fallthru
        _
    $region6: #{tpu_custom_call.1} parent=1 // loop_footer
      %s16 = sadd.s32 1, %s12
    $region7: #{tpu_custom_call.1} parent=1 // loop_footer_branch
      %11 = sbr.rel target = $region3
    $region8: #{tpu_custom_call.1} parent=1 // loop_exit
      _
    %325 = vsyncpa [#allocation3], 1
    %s326 = scalar_lea.sflag [#allocation3], 1
    %327 = vsyncpa %s326, 1

</llo_original>
